<compile_context>
chip_gen: v5e
topology: v5e:2x2
jax: 0.10.0
libtpu: 0.0.40
codegen_flags: <defaults>
</compile_context>

<pallas_src>
import functools

import jax
import jax.numpy as jnp
import numpy as np
from jax.experimental import pallas as pl
from jax.experimental.pallas import tpu as pltpu


# ----------------------------------------------------------------------------
# Kernel: conv3x3 -> ReLU -> conv3x3 on one folded (Bt*C, P) tile.
#   x_ref, o_ref : (BC, P) f32, BC = Bt*C sublanes, P = H*W lanes.
#   w*_ref       : (BC, 9*BC) compute_dtype, block-diagonal im2col weights.
#   b*_ref       : (BC, 1)  f32.
#   mask_ref     : (9*BC, P) f32 0/1 edge-validity mask (resident constant).
#   col_ref      : (9*BC, P) f32 VMEM scratch holding the im2col stack.
# ----------------------------------------------------------------------------
def _ff_kernel(x_ref, w1_ref, b1_ref, w2_ref, b2_ref, mask_ref, o_ref, col_ref,
               *, H, W, BC, compute_dtype):
    P = H * W

    def conv3x3(img, w_ref, b_ref):
        # Stage the 9 tap views: roll the whole (BC, P) tile along the lane axis
        # (each row is one image, so rows roll independently).  Wrapped lanes are
        # zeroed by the precomputed mask right before the dot.
        t = 0
        for di in (-1, 0, 1):
            for dj in (-1, 0, 1):
                k = di * W + dj                              # sample offset p + k
                sh = img if k == 0 else pltpu.roll(img, shift=(-k) % P, axis=1)
                col_ref[pl.ds(t * BC, BC), :] = sh           # aligned 8-row store
                t += 1
        # Edge-mask + cast once, then ONE MXU dot per conv (f32 accumulation).
        cols = (col_ref[...] * mask_ref[...]).astype(compute_dtype)   # (9*BC, P)
        acc = jnp.dot(w_ref[...], cols, preferred_element_type=jnp.float32)
        return acc + b_ref[...]                               # (BC, P) f32

    h = jnp.maximum(conv3x3(x_ref[...], w1_ref, b1_ref), 0.0)   # conv1 + ReLU (f32)
    o_ref[...] = conv3x3(h, w2_ref, b2_ref).astype(o_ref.dtype)  # conv2


# ----------------------------------------------------------------------------
# One-time packing helpers (outside the per-call path)
# ----------------------------------------------------------------------------
def _pick_bt(batch, C, min_sublanes=8):
    # Smallest divisor Bt of batch with Bt*C >= 8 -> full sublanes, fewest steps.
    for bt in range(1, batch + 1):
        if batch % bt == 0 and bt * C >= min_sublanes:
            return bt
    return batch


def _pack_weights(w_oihw, Bt, dtype):
    # OIHW (co, ci, ki, kj) -> block-diagonal im2col matrix (Bt*C, 9*Bt*C):
    #   Wm[b*C+co, t*BC + b*C+ci] = w[co, ci, t//3, t%3]
    w = np.asarray(w_oihw, np.float32)
    C = w.shape[0]
    BC = Bt * C
    Wm = np.zeros((BC, 9 * BC), np.float32)
    for t in range(9):
        ki, kj = divmod(t, 3)
        blk = w[:, :, ki, kj]                               # (co, ci)
        for b in range(Bt):
            Wm[b * C:(b + 1) * C, t * BC + b * C: t * BC + (b + 1) * C] = blk
    return jnp.asarray(Wm, dtype)


def _pack_bias(b, Bt):
    b = np.asarray(b, np.float32)
    return jnp.asarray(np.tile(b, Bt).reshape(-1, 1), jnp.float32)   # (Bt*C, 1)


def _make_masks(H, W, BC):
    # (9*BC, P) 0/1 validity of tap (di, dj) at each flattened pixel.
    P = H * W
    rows = np.arange(P) // W
    cols = np.arange(P) % W
    m9 = np.zeros((9, P), np.float32)
    for t in range(9):
        di, dj = t // 3 - 1, t % 3 - 1
        valid = (rows + di >= 0) & (rows + di < H) & (cols + dj >= 0) & (cols + dj < W)
        m9[t] = valid.astype(np.float32)
    return jnp.asarray(np.repeat(m9, BC, axis=0))           # row t*BC + r = mask_t


# ----------------------------------------------------------------------------
# Builder: packs params once, returns a jitted forward(x_nchw)
# ----------------------------------------------------------------------------
def make_mlp_feedforward(params, *, batch, dim, height, width,
                         compute_dtype=jnp.bfloat16):
    C, H, W = dim, height, width
    P = H * W
    Bt = _pick_bt(batch, C)
    G = batch // Bt
    BC = Bt * C

    w1 = _pack_weights(params["w1"], Bt, compute_dtype)
    w2 = _pack_weights(params["w2"], Bt, compute_dtype)
    b1 = _pack_bias(params["b1"], Bt)
    b2 = _pack_bias(params["b2"], Bt)
    masks = _make_masks(H, W, BC)

    kernel = functools.partial(_ff_kernel, H=H, W=W, BC=BC,
                               compute_dtype=compute_dtype)

    call = pl.pallas_call(
        kernel,
        out_shape=jax.ShapeDtypeStruct((G, BC, P), jnp.float32),
        grid_spec=pltpu.PrefetchScalarGridSpec(
            num_scalar_prefetch=0,
            grid=(G,),
            in_specs=[
                pl.BlockSpec((None, BC, P), lambda g: (g, 0, 0)),   # x (folded batch)
                pl.BlockSpec((BC, 9 * BC), lambda g: (0, 0)),       # conv1 weights
                pl.BlockSpec((BC, 1), lambda g: (0, 0)),            # conv1 bias
                pl.BlockSpec((BC, 9 * BC), lambda g: (0, 0)),       # conv2 weights
                pl.BlockSpec((BC, 1), lambda g: (0, 0)),            # conv2 bias
                pl.BlockSpec((9 * BC, P), lambda g: (0, 0)),        # edge masks
            ],
            out_specs=pl.BlockSpec((None, BC, P), lambda g: (g, 0, 0)),
            scratch_shapes=[pltpu.VMEM((9 * BC, P), jnp.float32)],  # im2col stack
        ),
        compiler_params=pltpu.CompilerParams(
            dimension_semantics=("parallel",),
        ),
    )

    @jax.jit
    def forward(x_nchw):
        # (B, C, H, W) -> (G, Bt*C, H*W): contiguous row-major reshape, no transpose.
        x_fold = x_nchw.reshape(G, BC, P).astype(jnp.float32)
        out = call(x_fold, w1, b1, w2, b2, masks)
        return out.reshape(batch, C, H, W)

    return forward


# ----------------------------------------------------------------------------
# Pure-JAX references (numerical checks)
# ----------------------------------------------------------------------------
def mlp_feedforward_ref(x, params, compute_dtype=jnp.float32):
    def conv(inp, w, b):
        y = jax.lax.conv_general_dilated(
            inp.astype(compute_dtype), jnp.asarray(w, compute_dtype),
            window_strides=(1, 1), padding="SAME",
            dimension_numbers=("NCHW", "OIHW", "NCHW"),
            preferred_element_type=jnp.float32,
            precision=jax.lax.Precision.HIGHEST)
        return y + jnp.asarray(b, jnp.float32).reshape(1, -1, 1, 1)

    t = jnp.maximum(conv(x, params["w1"], params["b1"]), 0.0)
    return conv(t, params["w2"], params["b2"])


# ----------------------------------------------------------------------------
# Deterministic params + run
# ----------------------------------------------------------------------------
def init_params(key, dim):
    ks = jax.random.split(key, 4)
    return {
        "w1": 0.2 * jax.random.normal(ks[0], (dim, dim, 3, 3), jnp.float32),  # OIHW
        "b1": 0.1 * jax.random.normal(ks[1], (dim,), jnp.float32),
        "w2": 0.2 * jax.random.normal(ks[2], (dim, dim, 3, 3), jnp.float32),
        "b2": 0.1 * jax.random.normal(ks[3], (dim,), jnp.float32),
    }


if __name__ == "__main__":
    B, dim, H, W = 2, 4, 16, 16          # hidden_dim / dropout unused by forward

    key = jax.random.PRNGKey(0)
    k_x, k_p = jax.random.split(key)
    x = jax.random.normal(k_x, (B, dim, H, W), jnp.float32)   # NCHW like PyTorch
    params = init_params(k_p, dim)

    # Performance path: bf16 dot operands, f32 accumulation / elementwise.
    fwd_bf16 = make_mlp_feedforward(params, batch=B, dim=dim, height=H, width=W,
                                    compute_dtype=jnp.bfloat16)
    out = jax.block_until_ready(fwd_bf16(x))
    assert out.shape == (B, dim, H, W)

    # Exactness path: same kernel structure with f32 dot operands.
    fwd_f32 = make_mlp_feedforward(params, batch=B, dim=dim, height=H, width=W,
                                   compute_dtype=jnp.float32)
    out_f32 = jax.block_until_ready(fwd_f32(x))

    ref_f32 = jax.block_until_ready(mlp_feedforward_ref(x, params, jnp.float32))
    ref_bf16 = jax.block_until_ready(mlp_feedforward_ref(x, params, jnp.bfloat16))

    # 1) structural correctness, bit-tight (f32 kernel vs f32 reference)
    np.testing.assert_allclose(np.asarray(out_f32), np.asarray(ref_f32),
                               rtol=1e-4, atol=1e-4)
    # 2) bf16 kernel vs matched bf16-operand reference (f32 accumulation in both)
    np.testing.assert_allclose(np.asarray(out), np.asarray(ref_bf16),
                               rtol=2e-2, atol=2e-2)
    # 3) bf16 kernel stays close to the full-f32 module semantics
    np.testing.assert_allclose(np.asarray(out), np.asarray(ref_f32),
                               rtol=1e-1, atol=1e-1)

    print("KERNEL_OK")
</pallas_src>

<mosaic_0001>
module attributes {stable_mosaic.version = 11 : i64} {
  func.func @_ff_kernel(%arg0: i32, %arg1: memref<1x8x256xf32, #tpu.memory_space<vmem>>, %arg2: memref<8x72xbf16, #tpu.memory_space<vmem>>, %arg3: memref<8x1xf32, #tpu.memory_space<vmem>>, %arg4: memref<8x72xbf16, #tpu.memory_space<vmem>>, %arg5: memref<8x1xf32, #tpu.memory_space<vmem>>, %arg6: memref<72x256xf32, #tpu.memory_space<vmem>>, %arg7: memref<1x8x256xf32, #tpu.memory_space<vmem>>, %arg8: memref<72x256xf32, #tpu.memory_space<vmem>>) attributes {dimension_semantics = [#tpu.dimension_semantics<parallel>], iteration_bounds = array<i64: 1>, scalar_prefetch = 0 : i64, scratch_operands = 1 : i64, tpu.core_type = #tpu.core_type<tc>, window_params = [{transform_indices = @transform_0, window_bounds = array<i64: 1, 8, 256>}, {pipeline_mode = #tpu.pipeline_mode<synchronous>, transform_indices = @transform_1, window_bounds = array<i64: 8, 72>}, {pipeline_mode = #tpu.pipeline_mode<synchronous>, transform_indices = @transform_2, window_bounds = array<i64: 8, 1>}, {pipeline_mode = #tpu.pipeline_mode<synchronous>, transform_indices = @transform_3, window_bounds = array<i64: 8, 72>}, {pipeline_mode = #tpu.pipeline_mode<synchronous>, transform_indices = @transform_4, window_bounds = array<i64: 8, 1>}, {pipeline_mode = #tpu.pipeline_mode<synchronous>, transform_indices = @transform_5, window_bounds = array<i64: 72, 256>}, {transform_indices = @transform_6, window_bounds = array<i64: 1, 8, 256>}]} {
    %c0 = arith.constant 0 : index
    %c0_0 = arith.constant 0 : index
    %c0_1 = arith.constant 0 : index
    %0 = vector.load %arg1[%c0, %c0_0, %c0_1] : memref<1x8x256xf32, #tpu.memory_space<vmem>>, vector<1x8x256xf32>
    %1 = vector.shape_cast %0 : vector<1x8x256xf32> to vector<8x256xf32>
    %c17_i32 = arith.constant 17 : i32
    %2 = tpu.dynamic_rotate %1 by %c17_i32 dim 1 : vector<8x256xf32>, i32 -> vector<8x256xf32>
    %c0_2 = arith.constant 0 : index
    %c0_3 = arith.constant 0 : index
    %3 = vector.load %arg8[%c0_2, %c0_3] : memref<72x256xf32, #tpu.memory_space<vmem>>, vector<8x256xf32>
    tpu.vector_store %arg8[%c0_2, %c0_3], %2 {strides = array<i32>} : memref<72x256xf32, #tpu.memory_space<vmem>>, vector<8x256xf32>,
    %c16_i32 = arith.constant 16 : i32
    %4 = tpu.dynamic_rotate %1 by %c16_i32 dim 1 : vector<8x256xf32>, i32 -> vector<8x256xf32>
    %c8 = arith.constant 8 : index
    %c0_4 = arith.constant 0 : index
    %5 = vector.load %arg8[%c8, %c0_4] : memref<72x256xf32, #tpu.memory_space<vmem>>, vector<8x256xf32>
    tpu.vector_store %arg8[%c8, %c0_4], %4 {strides = array<i32>} : memref<72x256xf32, #tpu.memory_space<vmem>>, vector<8x256xf32>,
    %c15_i32 = arith.constant 15 : i32
    %6 = tpu.dynamic_rotate %1 by %c15_i32 dim 1 : vector<8x256xf32>, i32 -> vector<8x256xf32>
    %c16 = arith.constant 16 : index
    %c0_5 = arith.constant 0 : index
    %7 = vector.load %arg8[%c16, %c0_5] : memref<72x256xf32, #tpu.memory_space<vmem>>, vector<8x256xf32>
    tpu.vector_store %arg8[%c16, %c0_5], %6 {strides = array<i32>} : memref<72x256xf32, #tpu.memory_space<vmem>>, vector<8x256xf32>,
    %c1_i32 = arith.constant 1 : i32
    %8 = tpu.dynamic_rotate %1 by %c1_i32 dim 1 : vector<8x256xf32>, i32 -> vector<8x256xf32>
    %c24 = arith.constant 24 : index
    %c0_6 = arith.constant 0 : index
    %9 = vector.load %arg8[%c24, %c0_6] : memref<72x256xf32, #tpu.memory_space<vmem>>, vector<8x256xf32>
    tpu.vector_store %arg8[%c24, %c0_6], %8 {strides = array<i32>} : memref<72x256xf32, #tpu.memory_space<vmem>>, vector<8x256xf32>,
    %c32 = arith.constant 32 : index
    %c0_7 = arith.constant 0 : index
    %10 = vector.load %arg8[%c32, %c0_7] : memref<72x256xf32, #tpu.memory_space<vmem>>, vector<8x256xf32>
    tpu.vector_store %arg8[%c32, %c0_7], %1 {strides = array<i32>} : memref<72x256xf32, #tpu.memory_space<vmem>>, vector<8x256xf32>,
    %c255_i32 = arith.constant 255 : i32
    %11 = tpu.dynamic_rotate %1 by %c255_i32 dim 1 : vector<8x256xf32>, i32 -> vector<8x256xf32>
    %c40 = arith.constant 40 : index
    %c0_8 = arith.constant 0 : index
    %12 = vector.load %arg8[%c40, %c0_8] : memref<72x256xf32, #tpu.memory_space<vmem>>, vector<8x256xf32>
    tpu.vector_store %arg8[%c40, %c0_8], %11 {strides = array<i32>} : memref<72x256xf32, #tpu.memory_space<vmem>>, vector<8x256xf32>,
    %c241_i32 = arith.constant 241 : i32
    %13 = tpu.dynamic_rotate %1 by %c241_i32 dim 1 : vector<8x256xf32>, i32 -> vector<8x256xf32>
    %c48 = arith.constant 48 : index
    %c0_9 = arith.constant 0 : index
    %14 = vector.load %arg8[%c48, %c0_9] : memref<72x256xf32, #tpu.memory_space<vmem>>, vector<8x256xf32>
    tpu.vector_store %arg8[%c48, %c0_9], %13 {strides = array<i32>} : memref<72x256xf32, #tpu.memory_space<vmem>>, vector<8x256xf32>,
    %c240_i32 = arith.constant 240 : i32
    %15 = tpu.dynamic_rotate %1 by %c240_i32 dim 1 : vector<8x256xf32>, i32 -> vector<8x256xf32>
    %c56 = arith.constant 56 : index
    %c0_10 = arith.constant 0 : index
    %16 = vector.load %arg8[%c56, %c0_10] : memref<72x256xf32, #tpu.memory_space<vmem>>, vector<8x256xf32>
    tpu.vector_store %arg8[%c56, %c0_10], %15 {strides = array<i32>} : memref<72x256xf32, #tpu.memory_space<vmem>>, vector<8x256xf32>,
    %c239_i32 = arith.constant 239 : i32
    %17 = tpu.dynamic_rotate %1 by %c239_i32 dim 1 : vector<8x256xf32>, i32 -> vector<8x256xf32>
    %c64 = arith.constant 64 : index
    %c0_11 = arith.constant 0 : index
    %18 = vector.load %arg8[%c64, %c0_11] : memref<72x256xf32, #tpu.memory_space<vmem>>, vector<8x256xf32>
    tpu.vector_store %arg8[%c64, %c0_11], %17 {strides = array<i32>} : memref<72x256xf32, #tpu.memory_space<vmem>>, vector<8x256xf32>,
    %c0_12 = arith.constant 0 : index
    %c0_13 = arith.constant 0 : index
    %19 = vector.load %arg8[%c0_12, %c0_13] : memref<72x256xf32, #tpu.memory_space<vmem>>, vector<72x256xf32>
    %c0_14 = arith.constant 0 : index
    %c0_15 = arith.constant 0 : index
    %20 = vector.load %arg6[%c0_14, %c0_15] : memref<72x256xf32, #tpu.memory_space<vmem>>, vector<72x256xf32>
    %21 = arith.mulf %19, %20 : vector<72x256xf32>
    %22 = arith.truncf %21 : vector<72x256xf32> to vector<72x256xbf16>
    %c0_16 = arith.constant 0 : index
    %c0_17 = arith.constant 0 : index
    %23 = vector.load %arg2[%c0_16, %c0_17] : memref<8x72xbf16, #tpu.memory_space<vmem>>, vector<8x72xbf16>
    %cst = arith.constant dense<0.000000e+00> : vector<8x256xf32>
    %24 = tpu.matmul %23, %22, %cst {dimension_numbers = #tpu.dot_dimension_numbers<[1], [0], [0], [1], [0, 0, 1, 1], [], []>} : vector<8x72xbf16>, vector<72x256xbf16>, vector<8x256xf32> -> vector<8x256xf32>
    %c0_18 = arith.constant 0 : index
    %c0_19 = arith.constant 0 : index
    %25 = vector.load %arg3[%c0_18, %c0_19] : memref<8x1xf32, #tpu.memory_space<vmem>>, vector<8x1xf32>
    %26 = vector.broadcast %25 : vector<8x1xf32> to vector<8x256xf32>
    %27 = arith.addf %24, %26 : vector<8x256xf32>
    %cst_20 = arith.constant 0.000000e+00 : f32
    %28 = vector.broadcast %cst_20 : f32 to vector<8x256xf32>
    %29 = arith.maximumf %27, %28 : vector<8x256xf32>
    %c17_i32_21 = arith.constant 17 : i32
    %30 = tpu.dynamic_rotate %29 by %c17_i32_21 dim 1 : vector<8x256xf32>, i32 -> vector<8x256xf32>
    %c0_22 = arith.constant 0 : index
    %c0_23 = arith.constant 0 : index
    %31 = vector.load %arg8[%c0_22, %c0_23] : memref<72x256xf32, #tpu.memory_space<vmem>>, vector<8x256xf32>
    tpu.vector_store %arg8[%c0_22, %c0_23], %30 {strides = array<i32>} : memref<72x256xf32, #tpu.memory_space<vmem>>, vector<8x256xf32>,
    %c16_i32_24 = arith.constant 16 : i32
    %32 = tpu.dynamic_rotate %29 by %c16_i32_24 dim 1 : vector<8x256xf32>, i32 -> vector<8x256xf32>
    %c8_25 = arith.constant 8 : index
    %c0_26 = arith.constant 0 : index
    %33 = vector.load %arg8[%c8_25, %c0_26] : memref<72x256xf32, #tpu.memory_space<vmem>>, vector<8x256xf32>
    tpu.vector_store %arg8[%c8_25, %c0_26], %32 {strides = array<i32>} : memref<72x256xf32, #tpu.memory_space<vmem>>, vector<8x256xf32>,
    %c15_i32_27 = arith.constant 15 : i32
    %34 = tpu.dynamic_rotate %29 by %c15_i32_27 dim 1 : vector<8x256xf32>, i32 -> vector<8x256xf32>
    %c16_28 = arith.constant 16 : index
    %c0_29 = arith.constant 0 : index
    %35 = vector.load %arg8[%c16_28, %c0_29] : memref<72x256xf32, #tpu.memory_space<vmem>>, vector<8x256xf32>
    tpu.vector_store %arg8[%c16_28, %c0_29], %34 {strides = array<i32>} : memref<72x256xf32, #tpu.memory_space<vmem>>, vector<8x256xf32>,
    %c1_i32_30 = arith.constant 1 : i32
    %36 = tpu.dynamic_rotate %29 by %c1_i32_30 dim 1 : vector<8x256xf32>, i32 -> vector<8x256xf32>
    %c24_31 = arith.constant 24 : index
    %c0_32 = arith.constant 0 : index
    %37 = vector.load %arg8[%c24_31, %c0_32] : memref<72x256xf32, #tpu.memory_space<vmem>>, vector<8x256xf32>
    tpu.vector_store %arg8[%c24_31, %c0_32], %36 {strides = array<i32>} : memref<72x256xf32, #tpu.memory_space<vmem>>, vector<8x256xf32>,
    %c32_33 = arith.constant 32 : index
    %c0_34 = arith.constant 0 : index
    %38 = vector.load %arg8[%c32_33, %c0_34] : memref<72x256xf32, #tpu.memory_space<vmem>>, vector<8x256xf32>
    tpu.vector_store %arg8[%c32_33, %c0_34], %29 {strides = array<i32>} : memref<72x256xf32, #tpu.memory_space<vmem>>, vector<8x256xf32>,
    %c255_i32_35 = arith.constant 255 : i32
    %39 = tpu.dynamic_rotate %29 by %c255_i32_35 dim 1 : vector<8x256xf32>, i32 -> vector<8x256xf32>
    %c40_36 = arith.constant 40 : index
    %c0_37 = arith.constant 0 : index
    %40 = vector.load %arg8[%c40_36, %c0_37] : memref<72x256xf32, #tpu.memory_space<vmem>>, vector<8x256xf32>
    tpu.vector_store %arg8[%c40_36, %c0_37], %39 {strides = array<i32>} : memref<72x256xf32, #tpu.memory_space<vmem>>, vector<8x256xf32>,
    %c241_i32_38 = arith.constant 241 : i32
    %41 = tpu.dynamic_rotate %29 by %c241_i32_38 dim 1 : vector<8x256xf32>, i32 -> vector<8x256xf32>
    %c48_39 = arith.constant 48 : index
    %c0_40 = arith.constant 0 : index
    %42 = vector.load %arg8[%c48_39, %c0_40] : memref<72x256xf32, #tpu.memory_space<vmem>>, vector<8x256xf32>
    tpu.vector_store %arg8[%c48_39, %c0_40], %41 {strides = array<i32>} : memref<72x256xf32, #tpu.memory_space<vmem>>, vector<8x256xf32>,
    %c240_i32_41 = arith.constant 240 : i32
    %43 = tpu.dynamic_rotate %29 by %c240_i32_41 dim 1 : vector<8x256xf32>, i32 -> vector<8x256xf32>
    %c56_42 = arith.constant 56 : index
    %c0_43 = arith.constant 0 : index
    %44 = vector.load %arg8[%c56_42, %c0_43] : memref<72x256xf32, #tpu.memory_space<vmem>>, vector<8x256xf32>
    tpu.vector_store %arg8[%c56_42, %c0_43], %43 {strides = array<i32>} : memref<72x256xf32, #tpu.memory_space<vmem>>, vector<8x256xf32>,
    %c239_i32_44 = arith.constant 239 : i32
    %45 = tpu.dynamic_rotate %29 by %c239_i32_44 dim 1 : vector<8x256xf32>, i32 -> vector<8x256xf32>
    %c64_45 = arith.constant 64 : index
    %c0_46 = arith.constant 0 : index
    %46 = vector.load %arg8[%c64_45, %c0_46] : memref<72x256xf32, #tpu.memory_space<vmem>>, vector<8x256xf32>
    tpu.vector_store %arg8[%c64_45, %c0_46], %45 {strides = array<i32>} : memref<72x256xf32, #tpu.memory_space<vmem>>, vector<8x256xf32>,
    %c0_47 = arith.constant 0 : index
    %c0_48 = arith.constant 0 : index
    %47 = vector.load %arg8[%c0_47, %c0_48] : memref<72x256xf32, #tpu.memory_space<vmem>>, vector<72x256xf32>
    %c0_49 = arith.constant 0 : index
    %c0_50 = arith.constant 0 : index
    %48 = vector.load %arg6[%c0_49, %c0_50] : memref<72x256xf32, #tpu.memory_space<vmem>>, vector<72x256xf32>
    %49 = arith.mulf %47, %48 : vector<72x256xf32>
    %50 = arith.truncf %49 : vector<72x256xf32> to vector<72x256xbf16>
    %c0_51 = arith.constant 0 : index
    %c0_52 = arith.constant 0 : index
    %51 = vector.load %arg4[%c0_51, %c0_52] : memref<8x72xbf16, #tpu.memory_space<vmem>>, vector<8x72xbf16>
    %cst_53 = arith.constant dense<0.000000e+00> : vector<8x256xf32>
    %52 = tpu.matmul %51, %50, %cst_53 {dimension_numbers = #tpu.dot_dimension_numbers<[1], [0], [0], [1], [0, 0, 1, 1], [], []>} : vector<8x72xbf16>, vector<72x256xbf16>, vector<8x256xf32> -> vector<8x256xf32>
    %c0_54 = arith.constant 0 : index
    %c0_55 = arith.constant 0 : index
    %53 = vector.load %arg5[%c0_54, %c0_55] : memref<8x1xf32, #tpu.memory_space<vmem>>, vector<8x1xf32>
    %54 = vector.broadcast %53 : vector<8x1xf32> to vector<8x256xf32>
    %55 = arith.addf %52, %54 : vector<8x256xf32>
    %c0_56 = arith.constant 0 : index
    %c0_57 = arith.constant 0 : index
    %c0_58 = arith.constant 0 : index
    %56 = vector.load %arg7[%c0_56, %c0_57, %c0_58] : memref<1x8x256xf32, #tpu.memory_space<vmem>>, vector<1x8x256xf32>
    %57 = vector.shape_cast %56 : vector<1x8x256xf32> to vector<8x256xf32>
    %58 = vector.shape_cast %55 : vector<8x256xf32> to vector<1x8x256xf32>
    tpu.vector_store %arg7[%c0_56, %c0_57, %c0_58], %58 {strides = array<i32>} : memref<1x8x256xf32, #tpu.memory_space<vmem>>, vector<1x8x256xf32>,
    return
  }
  func.func @transform_0(%arg0: i32) -> (i32, i32, i32) {
    %c0_i32 = arith.constant 0 : i32
    %c0_i32_0 = arith.constant 0 : i32
    %c0_i32_1 = arith.constant 0 : i32
    return %arg0, %c0_i32, %c0_i32_0 : i32, i32, i32
  }
  func.func @transform_1(%arg0: i32) -> (i32, i32) {
    %c0_i32 = arith.constant 0 : i32
    %c0_i32_0 = arith.constant 0 : i32
    %c0_i32_1 = arith.constant 0 : i32
    return %c0_i32, %c0_i32_0 : i32, i32
  }
  func.func @transform_2(%arg0: i32) -> (i32, i32) {
    %c0_i32 = arith.constant 0 : i32
    %c0_i32_0 = arith.constant 0 : i32
    %c0_i32_1 = arith.constant 0 : i32
    return %c0_i32, %c0_i32_0 : i32, i32
  }
  func.func @transform_3(%arg0: i32) -> (i32, i32) {
    %c0_i32 = arith.constant 0 : i32
    %c0_i32_0 = arith.constant 0 : i32
    %c0_i32_1 = arith.constant 0 : i32
    return %c0_i32, %c0_i32_0 : i32, i32
  }
  func.func @transform_4(%arg0: i32) -> (i32, i32) {
    %c0_i32 = arith.constant 0 : i32
    %c0_i32_0 = arith.constant 0 : i32
    %c0_i32_1 = arith.constant 0 : i32
    return %c0_i32, %c0_i32_0 : i32, i32
  }
  func.func @transform_5(%arg0: i32) -> (i32, i32) {
    %c0_i32 = arith.constant 0 : i32
    %c0_i32_0 = arith.constant 0 : i32
    %c0_i32_1 = arith.constant 0 : i32
    return %c0_i32, %c0_i32_0 : i32, i32
  }
  func.func @transform_6(%arg0: i32) -> (i32, i32, i32) {
    %c0_i32 = arith.constant 0 : i32
    %c0_i32_0 = arith.constant 0 : i32
    %c0_i32_1 = arith.constant 0 : i32
    return %arg0, %c0_i32, %c0_i32_0 : i32, i32, i32
  }
}

</mosaic_0001>

<llo_original>
// kernel: forward.1
$region0: #{forward.1}
  #allocation0 [shape = 'u32[]', space=smem, size = 0x4, offset = 0x4, fixed_abs, tag = 'smem constant byte address 0x4 - core index']
  #allocation1 [shape = 'u32[72,128]{1,0:T(1,128)}', space=vmem, size = 0x9000, scoped, tag = 'internal scratch']
  #allocation2 [shape = 'f32[72,256]{1,0:T(8,128)}', space=vmem, size = 0x12000, scoped, tag = 'scratch operand']
  %s0 = inlined_call_operand.vmem [shape: f32[1,8,256], index: 0, kind: input, shape index: {}]
  %s1 = inlined_call_operand.hbm [shape: bf16[8,72], index: 1, kind: input, shape index: {}]
  %s2 = inlined_call_operand.hbm [shape: f32[8,1], index: 2, kind: input, shape index: {}]
  %s3 = inlined_call_operand.vmem [shape: bf16[8,72], index: 3, kind: input, shape index: {}]
  %s4 = inlined_call_operand.hbm [shape: f32[8,1], index: 4, kind: input, shape index: {}]
  %s5 = inlined_call_operand.vmem [shape: f32[72,256], index: 5, kind: input, shape index: {}]
  %s6 = inlined_call_operand.vmem [shape: f32[1,8,256], index: 6, kind: output, shape index: {}]
  %s7 = sld [smem:[#allocation0]]
  $region46: #{forward.1} parent=0
    _
  %s9 = ssub.s32 1, %s7
  %s10 = scalar_select 0, %s9, %s7
  $region1: #{forward.1} parent=0
    #allocation3 [shape = 'u8[2048]{0}', space=vmem, size = 0x800, scoped, tag = 'input window, operand 1, single buffered']
    #allocation4 [shape = 's32[1]{0}', space=sflag, size = 0x4, scoped, tag = 'scoped memory for forward.1']
    #allocation5 [shape = 'u8[4096]{0}', space=vmem, size = 0x1000, scoped, tag = 'input window, operand 2, single buffered']
    #allocation6 [shape = 's32[1]{0}', space=sflag, size = 0x4, scoped, tag = 'scoped memory for forward.1']
    #allocation7 [shape = 'u8[4096]{0}', space=vmem, size = 0x1000, scoped, tag = 'input window, operand 4, single buffered']
    %11 = vsyncpa [#allocation4], 0
    %12 = vsyncpa [#allocation6], 0
    // Predicated region
    $region2: #{forward.1} parent=1 // pred_check
      _
    $region3: #{forward.1} parent=1 // pred_check_branch
      %14 = sbr.rel (0) target = $region5
    $region4: #{forward.1} parent=1 // pred_region
      _
    $region5: #{forward.1} parent=1 // pred_fallthru
      _
    // Predicated region
    $region6: #{forward.1} parent=1 // pred_check
      _
    $region7: #{forward.1} parent=1 // pred_check_branch
      %16 = sbr.rel (0) target = $region9
    $region8: #{forward.1} parent=1 // pred_region
      %18 = vsyncadd [#allocation4], 0
      %s20 = sshll.u32 %s1, 4
      %s21 = int_to_ptr.hbm [resolvable:$true] %s20
      %s22 = sshll.u32 [#allocation3], 4
      %s23 = int_to_ptr.vmem [resolvable:$true] %s22
      %25 = dma.hbm_to_vmem [thread:$0]  %s21, 64, %s23, [#allocation4]
    $region9: #{forward.1} parent=1 // pred_fallthru
      _
    // Predicated region
    $region10: #{forward.1} parent=1 // pred_check
      _
    $region11: #{forward.1} parent=1 // pred_check_branch
      %27 = sbr.rel (0) target = $region13
    $region12: #{forward.1} parent=1 // pred_region
      %29 = vsyncadd [#allocation6], 0
      %s31 = sshll.u32 %s2, 4
      %s32 = int_to_ptr.hbm [resolvable:$true] %s31
      %s33 = sshll.u32 [#allocation5], 4
      %s34 = int_to_ptr.vmem [resolvable:$true] %s33
      %36 = dma.hbm_to_vmem [thread:$0]  %s32, 128, %s34, [#allocation6]
    $region13: #{forward.1} parent=1 // pred_fallthru
      _
    // Predicated region
    $region14: #{forward.1} parent=1 // pred_check
      _
    $region15: #{forward.1} parent=1 // pred_check_branch
      %38 = sbr.rel (0) target = $region17
    $region16: #{forward.1} parent=1 // pred_region
      _
    $region17: #{forward.1} parent=1 // pred_fallthru
      _
    // Predicated region
    $region18: #{forward.1} parent=1 // pred_check
      _
    $region19: #{forward.1} parent=1 // pred_check_branch
      %40 = sbr.rel (0) target = $region21
    $region20: #{forward.1} parent=1 // pred_region
      %42 = vsyncadd [#allocation6], 0
      %s44 = sshll.u32 %s4, 4
      %s45 = int_to_ptr.hbm [resolvable:$true] %s44
      %s46 = sshll.u32 [#allocation7], 4
      %s47 = int_to_ptr.vmem [resolvable:$true] %s46
      %49 = dma.hbm_to_vmem [thread:$0]  %s45, 128, %s47, [#allocation6]
    $region21: #{forward.1} parent=1 // pred_fallthru
      _
    // Predicated region
    $region22: #{forward.1} parent=1 // pred_check
      _
    $region23: #{forward.1} parent=1 // pred_check_branch
      %51 = sbr.rel (0) target = $region25
    $region24: #{forward.1} parent=1 // pred_region
      _
    $region25: #{forward.1} parent=1 // pred_fallthru
      _
    // Predicated region
    $region26: #{forward.1} parent=1 // pred_check
      _
    $region27: #{forward.1} parent=1 // pred_check_branch
      %53 = sbr.rel (0) target = $region29
    $region28: #{forward.1} parent=1 // pred_region
      %55 = dma.done [#allocation4], 64
    $region29: #{forward.1} parent=1 // pred_fallthru
      _
    // Predicated region
    $region30: #{forward.1} parent=1 // pred_check
      _
    $region31: #{forward.1} parent=1 // pred_check_branch
      %57 = sbr.rel (0) target = $region33
    $region32: #{forward.1} parent=1 // pred_region
      %59 = dma.done [#allocation6], 128
    $region33: #{forward.1} parent=1 // pred_fallthru
      _
    // Predicated region
    $region34: #{forward.1} parent=1 // pred_check
      _
    $region35: #{forward.1} parent=1 // pred_check_branch
      %61 = sbr.rel (0) target = $region37
    $region36: #{forward.1} parent=1 // pred_region
      %63 = dma.done [#allocation6], 128
    $region37: #{forward.1} parent=1 // pred_fallthru
      _
    %v65 = vld [vmem:[%s0] sm:$0xff]
    %v66 = vld [vmem:[%s0 + $0x8] sm:$0xff]
    %67 = vrot.lane.b32.xlu0 %v65, 17
    %v68 = vpop.permute.xlu0 %67
    %69 = vrot.lane.b32.xlu0 %v66, 17
    %v70 = vpop.permute.xlu0 %69
    %v71 = vlaneseq
    %v72 = vand.u32 %v71, 127
    %vm73 = vcmp.lt.s32.totalorder %v72, 17
    %v74 = vsel %vm73, %v68, %v70
    %v75 = vsel %vm73, %v70, %v68
    %76 = vst [vmem:[#allocation2] sm:$0xff] %v75
    %77 = vst [vmem:[#allocation2 + $0x8] sm:$0xff] %v74
    %78 = vrot.lane.b32.xlu0 %v65, 16
    %v79 = vpop.permute.xlu0 %78
    %80 = vrot.lane.b32.xlu0 %v66, 16
    %v81 = vpop.permute.xlu0 %80
    %vm82 = vcmp.lt.s32.totalorder %v72, 16
    %v83 = vsel %vm82, %v79, %v81
    %v84 = vsel %vm82, %v81, %v79
    %85 = vst [vmem:[#allocation2 + $0x10] sm:$0xff] %v84
    %86 = vst [vmem:[#allocation2 + $0x18] sm:$0xff] %v83
    %87 = vrot.lane.b32.xlu0 %v65, 15
    %v88 = vpop.permute.xlu0 %87
    %89 = vrot.lane.b32.xlu0 %v66, 15
    %v90 = vpop.permute.xlu0 %89
    %vm91 = vcmp.lt.s32.totalorder %v72, 15
    %v92 = vsel %vm91, %v88, %v90
    %v93 = vsel %vm91, %v90, %v88
    %94 = vst [vmem:[#allocation2 + $0x20] sm:$0xff] %v93
    %95 = vst [vmem:[#allocation2 + $0x28] sm:$0xff] %v92
    %96 = vrot.lane.b32.xlu0 %v65, 1
    %v97 = vpop.permute.xlu0 %96
    %98 = vrot.lane.b32.xlu0 %v66, 1
    %v99 = vpop.permute.xlu0 %98
    %vm100 = vcmp.lt.s32.totalorder %v72, 1
    %v101 = vsel %vm100, %v97, %v99
    %v102 = vsel %vm100, %v99, %v97
    %103 = vst [vmem:[#allocation2 + $0x30] sm:$0xff] %v102
    %104 = vst [vmem:[#allocation2 + $0x38] sm:$0xff] %v101
    %105 = vst [vmem:[#allocation2 + $0x40] sm:$0xff] %v65
    %106 = vst [vmem:[#allocation2 + $0x48] sm:$0xff] %v66
    %107 = vrot.lane.b32.xlu0 %v65, 127
    %v108 = vpop.permute.xlu0 %107
    %109 = vrot.lane.b32.xlu0 %v66, 127
    %v110 = vpop.permute.xlu0 %109
    %vm111 = vcmp.lt.s32.totalorder %v72, 127
    %v112 = vsel %vm111, %v108, %v110
    %v113 = vsel %vm111, %v110, %v108
    %114 = vst [vmem:[#allocation2 + $0x50] sm:$0xff] %v112
    %115 = vst [vmem:[#allocation2 + $0x58] sm:$0xff] %v113
    %116 = vrot.lane.b32.xlu0 %v65, 113
    %v117 = vpop.permute.xlu0 %116
    %118 = vrot.lane.b32.xlu0 %v66, 113
    %v119 = vpop.permute.xlu0 %118
    %vm120 = vcmp.lt.s32.totalorder %v72, 113
    %v121 = vsel %vm120, %v117, %v119
    %v122 = vsel %vm120, %v119, %v117
    %123 = vst [vmem:[#allocation2 + $0x60] sm:$0xff] %v121
    %124 = vst [vmem:[#allocation2 + $0x68] sm:$0xff] %v122
    %125 = vrot.lane.b32.xlu0 %v65, 112
    %v126 = vpop.permute.xlu0 %125
    %127 = vrot.lane.b32.xlu0 %v66, 112
    %v128 = vpop.permute.xlu0 %127
    %vm129 = vcmp.lt.s32.totalorder %v72, 112
    %v130 = vsel %vm129, %v126, %v128
    %v131 = vsel %vm129, %v128, %v126
    %132 = vst [vmem:[#allocation2 + $0x70] sm:$0xff] %v130
    %133 = vst [vmem:[#allocation2 + $0x78] sm:$0xff] %v131
    %134 = vrot.lane.b32.xlu0 %v65, 111
    %v135 = vpop.permute.xlu0 %134
    %136 = vrot.lane.b32.xlu0 %v66, 111
    %v137 = vpop.permute.xlu0 %136
    %vm138 = vcmp.lt.s32.totalorder %v72, 111
    %v139 = vsel %vm138, %v135, %v137
    %v140 = vsel %vm138, %v137, %v135
    %141 = vst [vmem:[#allocation2 + $0x80] sm:$0xff] %v139
    %142 = vst [vmem:[#allocation2 + $0x88] sm:$0xff] %v140
    %v143 = vld [vmem:[#allocation2] sm:$0xff]
    %v144 = vld [vmem:[#allocation2 + $0x8] sm:$0xff]
    %v145 = vld [vmem:[#allocation2 + $0x10] sm:$0xff]
    %v146 = vld [vmem:[#allocation2 + $0x18] sm:$0xff]
    %v147 = vld [vmem:[#allocation2 + $0x20] sm:$0xff]
    %v148 = vld [vmem:[#allocation2 + $0x28] sm:$0xff]
    %v149 = vld [vmem:[#allocation2 + $0x30] sm:$0xff]
    %v150 = vld [vmem:[#allocation2 + $0x38] sm:$0xff]
    %v151 = vld [vmem:[#allocation2 + $0x40] sm:$0xff]
    %v152 = vld [vmem:[#allocation2 + $0x48] sm:$0xff]
    %v153 = vld [vmem:[#allocation2 + $0x50] sm:$0xff]
    %v154 = vld [vmem:[#allocation2 + $0x58] sm:$0xff]
    %v155 = vld [vmem:[#allocation2 + $0x60] sm:$0xff]
    %v156 = vld [vmem:[#allocation2 + $0x68] sm:$0xff]
    %v157 = vld [vmem:[#allocation2 + $0x70] sm:$0xff]
    %v158 = vld [vmem:[#allocation2 + $0x78] sm:$0xff]
    %v159 = vld [vmem:[#allocation2 + $0x80] sm:$0xff]
    %v160 = vld [vmem:[#allocation2 + $0x88] sm:$0xff]
    %v161 = vld [vmem:[%s5] sm:$0xff]
    %v162 = vld [vmem:[%s5 + $0x8] sm:$0xff]
    %v163 = vld [vmem:[%s5 + $0x10] sm:$0xff]
    %v164 = vld [vmem:[%s5 + $0x18] sm:$0xff]
    %v165 = vld [vmem:[%s5 + $0x20] sm:$0xff]
    %v166 = vld [vmem:[%s5 + $0x28] sm:$0xff]
    %v167 = vld [vmem:[%s5 + $0x30] sm:$0xff]
    %v168 = vld [vmem:[%s5 + $0x38] sm:$0xff]
    %v169 = vld [vmem:[%s5 + $0x40] sm:$0xff]
    %v170 = vld [vmem:[%s5 + $0x48] sm:$0xff]
    %v171 = vld [vmem:[%s5 + $0x50] sm:$0xff]
    %v172 = vld [vmem:[%s5 + $0x58] sm:$0xff]
    %v173 = vld [vmem:[%s5 + $0x60] sm:$0xff]
    %v174 = vld [vmem:[%s5 + $0x68] sm:$0xff]
    %v175 = vld [vmem:[%s5 + $0x70] sm:$0xff]
    %v176 = vld [vmem:[%s5 + $0x78] sm:$0xff]
    %v177 = vld [vmem:[%s5 + $0x80] sm:$0xff]
    %v178 = vld [vmem:[%s5 + $0x88] sm:$0xff]
    %v179 = vmul.f32 %v143, %v161
    %v180 = vmul.f32 %v144, %v162
    %v181 = vmul.f32 %v145, %v163
    %v182 = vmul.f32 %v146, %v164
    %v183 = vmul.f32 %v147, %v165
    %v184 = vmul.f32 %v148, %v166
    %v185 = vmul.f32 %v149, %v167
    %v186 = vmul.f32 %v150, %v168
    %v187 = vmul.f32 %v151, %v169
    %v188 = vmul.f32 %v152, %v170
    %v189 = vmul.f32 %v153, %v171
    %v190 = vmul.f32 %v154, %v172
    %v191 = vmul.f32 %v155, %v173
    %v192 = vmul.f32 %v156, %v174
    %v193 = vmul.f32 %v157, %v175
    %v194 = vmul.f32 %v158, %v176
    %v195 = vmul.f32 %v159, %v177
    %v196 = vmul.f32 %v160, %v178
    %v197 = vpack.c.bf16 %v181, %v179
    %v198 = vpack.c.bf16 %v182, %v180
    %v199 = vpack.c.bf16 %v185, %v183
    %v200 = vpack.c.bf16 %v186, %v184
    %v201 = vpack.c.bf16 %v189, %v187
    %v202 = vpack.c.bf16 %v190, %v188
    %v203 = vpack.c.bf16 %v193, %v191
    %v204 = vpack.c.bf16 %v194, %v192
    %v205 = vpack.c.bf16 %v195, %v195
    %v206 = vpack.c.bf16 %v196, %v196
    %v207 = vld [vmem:[#allocation3] sm:$0xf]
    %v208 = vld [vmem:[#allocation5] sm:$0xff]
    %210 = vset.pattern.permute.xlu0 0
    %211 = vperm.xlu0 %210, %v208
    %v212 = vpop.permute.xlu0 %211
    %vm214 = vcmask 588800
    %v216 = vsel %vm214, %v207, 0
    %vm218 = vcmask 1043456
    %v220 = vsel %vm218, %v205, 0
    %v223 = vsel %vm218, %v206, 0
    %225 = vmatpush.bf16.msra.mxu0 0
    %226 = vmatpush.bf16.msra.mxu0 0
    %227 = vmatpush.bf16.msra.mxu0 0
    %228 = vmatpush.bf16.msra.mxu0 %v220
    %229 = vmatpush.bf16.msra.mxu0 %v203
    %230 = vmatpush.bf16.msra.mxu0 %v201
    %231 = vmatpush.bf16.msra.mxu0 %v199
    %232 = vmatpush.bf16.msra.mxu0 %v197
    %233 = vmatmul.bf16.gmra.mxu0 %v216
    %v234 = vpop.f32.mrf.mxu0
    %v235 = vadd.f32 %v212, %v234
    %v236 = vpop.f32.mrf.mxu0
    %237 = vdwg.mxu0
    %238 = vmatpush.bf16.msra.mxu0 0
    %239 = vmatpush.bf16.msra.mxu0 0
    %240 = vmatpush.bf16.msra.mxu0 0
    %241 = vmatpush.bf16.msra.mxu0 %v223
    %242 = vmatpush.bf16.msra.mxu0 %v204
    %243 = vmatpush.bf16.msra.mxu0 %v202
    %244 = vmatpush.bf16.msra.mxu0 %v200
    %245 = vmatpush.bf16.msra.mxu0 %v198
    %246 = vmatmul.bf16.gmra.mxu0 %v216
    %v247 = vpop.f32.mrf.mxu0
    %v248 = vadd.f32 %v212, %v247
    %v249 = vpop.f32.mrf.mxu0
    %250 = vdwg.mxu0
    %v251 = vmax.f32 %v235, 0.0
    %v252 = vmax.f32 %v248, 0.0
    %253 = vrot.lane.b32.xlu0 %v251, 17
    %v254 = vpop.permute.xlu0 %253
    %255 = vrot.lane.b32.xlu0 %v252, 17
    %v256 = vpop.permute.xlu0 %255
    %v257 = vsel %vm73, %v254, %v256
    %v258 = vsel %vm73, %v256, %v254
    %259 = vst [vmem:[#allocation2] sm:$0xff] %v258
    %260 = vst [vmem:[#allocation2 + $0x8] sm:$0xff] %v257
    %261 = vrot.lane.b32.xlu0 %v251, 16
    %v262 = vpop.permute.xlu0 %261
    %263 = vrot.lane.b32.xlu0 %v252, 16
    %v264 = vpop.permute.xlu0 %263
    %v265 = vsel %vm82, %v262, %v264
    %v266 = vsel %vm82, %v264, %v262
    %267 = vst [vmem:[#allocation2 + $0x10] sm:$0xff] %v266
    %268 = vst [vmem:[#allocation2 + $0x18] sm:$0xff] %v265
    %269 = vrot.lane.b32.xlu0 %v251, 15
    %v270 = vpop.permute.xlu0 %269
    %271 = vrot.lane.b32.xlu0 %v252, 15
    %v272 = vpop.permute.xlu0 %271
    %v273 = vsel %vm91, %v270, %v272
    %v274 = vsel %vm91, %v272, %v270
    %275 = vst [vmem:[#allocation2 + $0x20] sm:$0xff] %v274
    %276 = vst [vmem:[#allocation2 + $0x28] sm:$0xff] %v273
    %277 = vrot.lane.b32.xlu0 %v251, 1
    %v278 = vpop.permute.xlu0 %277
    %279 = vrot.lane.b32.xlu0 %v252, 1
    %v280 = vpop.permute.xlu0 %279
    %v281 = vsel %vm100, %v278, %v280
    %v282 = vsel %vm100, %v280, %v278
    %283 = vst [vmem:[#allocation2 + $0x30] sm:$0xff] %v282
    %284 = vst [vmem:[#allocation2 + $0x38] sm:$0xff] %v281
    %285 = vst [vmem:[#allocation2 + $0x40] sm:$0xff] %v251
    %286 = vst [vmem:[#allocation2 + $0x48] sm:$0xff] %v252
    %287 = vrot.lane.b32.xlu0 %v251, 127
    %v288 = vpop.permute.xlu0 %287
    %289 = vrot.lane.b32.xlu0 %v252, 127
    %v290 = vpop.permute.xlu0 %289
    %v291 = vsel %vm111, %v288, %v290
    %v292 = vsel %vm111, %v290, %v288
    %293 = vst [vmem:[#allocation2 + $0x50] sm:$0xff] %v291
    %294 = vst [vmem:[#allocation2 + $0x58] sm:$0xff] %v292
    %295 = vrot.lane.b32.xlu0 %v251, 113
    %v296 = vpop.permute.xlu0 %295
    %297 = vrot.lane.b32.xlu0 %v252, 113
    %v298 = vpop.permute.xlu0 %297
    %v299 = vsel %vm120, %v296, %v298
    %v300 = vsel %vm120, %v298, %v296
    %301 = vst [vmem:[#allocation2 + $0x60] sm:$0xff] %v299
    %302 = vst [vmem:[#allocation2 + $0x68] sm:$0xff] %v300
    %303 = vrot.lane.b32.xlu0 %v251, 112
    %v304 = vpop.permute.xlu0 %303
    %305 = vrot.lane.b32.xlu0 %v252, 112
    %v306 = vpop.permute.xlu0 %305
    %v307 = vsel %vm129, %v304, %v306
    %v308 = vsel %vm129, %v306, %v304
    %309 = vst [vmem:[#allocation2 + $0x70] sm:$0xff] %v307
    %310 = vst [vmem:[#allocation2 + $0x78] sm:$0xff] %v308
    %311 = vrot.lane.b32.xlu0 %v251, 111
    %v312 = vpop.permute.xlu0 %311
    %313 = vrot.lane.b32.xlu0 %v252, 111
    %v314 = vpop.permute.xlu0 %313
    %v315 = vsel %vm138, %v312, %v314
    %v316 = vsel %vm138, %v314, %v312
    %317 = vst [vmem:[#allocation2 + $0x80] sm:$0xff] %v315
    %318 = vst [vmem:[#allocation2 + $0x88] sm:$0xff] %v316
    %v319 = vld [vmem:[#allocation2] sm:$0xff]
    %v320 = vld [vmem:[#allocation2 + $0x8] sm:$0xff]
    %v321 = vld [vmem:[#allocation2 + $0x10] sm:$0xff]
    %v322 = vld [vmem:[#allocation2 + $0x18] sm:$0xff]
    %v323 = vld [vmem:[#allocation2 + $0x20] sm:$0xff]
    %v324 = vld [vmem:[#allocation2 + $0x28] sm:$0xff]
    %v325 = vld [vmem:[#allocation2 + $0x30] sm:$0xff]
    %v326 = vld [vmem:[#allocation2 + $0x38] sm:$0xff]
    %v327 = vld [vmem:[#allocation2 + $0x40] sm:$0xff]
    %v328 = vld [vmem:[#allocation2 + $0x48] sm:$0xff]
    %v329 = vld [vmem:[#allocation2 + $0x50] sm:$0xff]
    %v330 = vld [vmem:[#allocation2 + $0x58] sm:$0xff]
    %v331 = vld [vmem:[#allocation2 + $0x60] sm:$0xff]
    %v332 = vld [vmem:[#allocation2 + $0x68] sm:$0xff]
    %v333 = vld [vmem:[#allocation2 + $0x70] sm:$0xff]
    %v334 = vld [vmem:[#allocation2 + $0x78] sm:$0xff]
    %v335 = vld [vmem:[#allocation2 + $0x80] sm:$0xff]
    %v336 = vld [vmem:[#allocation2 + $0x88] sm:$0xff]
    %v337 = vld [vmem:[%s5] sm:$0xff]
    %v338 = vld [vmem:[%s5 + $0x8] sm:$0xff]
    %v339 = vld [vmem:[%s5 + $0x10] sm:$0xff]
    %v340 = vld [vmem:[%s5 + $0x18] sm:$0xff]
    %v341 = vld [vmem:[%s5 + $0x20] sm:$0xff]
    %v342 = vld [vmem:[%s5 + $0x28] sm:$0xff]
    %v343 = vld [vmem:[%s5 + $0x30] sm:$0xff]
    %v344 = vld [vmem:[%s5 + $0x38] sm:$0xff]
    %v345 = vld [vmem:[%s5 + $0x40] sm:$0xff]
    %v346 = vld [vmem:[%s5 + $0x48] sm:$0xff]
    %v347 = vld [vmem:[%s5 + $0x50] sm:$0xff]
    %v348 = vld [vmem:[%s5 + $0x58] sm:$0xff]
    %v349 = vld [vmem:[%s5 + $0x60] sm:$0xff]
    %v350 = vld [vmem:[%s5 + $0x68] sm:$0xff]
    %v351 = vld [vmem:[%s5 + $0x70] sm:$0xff]
    %v352 = vld [vmem:[%s5 + $0x78] sm:$0xff]
    %v353 = vld [vmem:[%s5 + $0x80] sm:$0xff]
    %v354 = vld [vmem:[%s5 + $0x88] sm:$0xff]
    %v355 = vmul.f32 %v319, %v337
    %v356 = vmul.f32 %v320, %v338
    %v357 = vmul.f32 %v321, %v339
    %v358 = vmul.f32 %v322, %v340
    %v359 = vmul.f32 %v323, %v341
    %v360 = vmul.f32 %v324, %v342
    %v361 = vmul.f32 %v325, %v343
    %v362 = vmul.f32 %v326, %v344
    %v363 = vmul.f32 %v327, %v345
    %v364 = vmul.f32 %v328, %v346
    %v365 = vmul.f32 %v329, %v347
    %v366 = vmul.f32 %v330, %v348
    %v367 = vmul.f32 %v331, %v349
    %v368 = vmul.f32 %v332, %v350
    %v369 = vmul.f32 %v333, %v351
    %v370 = vmul.f32 %v334, %v352
    %v371 = vmul.f32 %v335, %v353
    %v372 = vmul.f32 %v336, %v354
    %v373 = vpack.c.bf16 %v357, %v355
    %v374 = vpack.c.bf16 %v358, %v356
    %v375 = vpack.c.bf16 %v361, %v359
    %v376 = vpack.c.bf16 %v362, %v360
    %v377 = vpack.c.bf16 %v365, %v363
    %v378 = vpack.c.bf16 %v366, %v364
    %v379 = vpack.c.bf16 %v369, %v367
    %v380 = vpack.c.bf16 %v370, %v368
    %v381 = vpack.c.bf16 %v371, %v371
    %v382 = vpack.c.bf16 %v372, %v372
    %v383 = vld [vmem:[%s3] sm:$0xf]
    %v384 = vld [vmem:[#allocation7] sm:$0xff]
    %386 = vset.pattern.permute.xlu0 0
    %387 = vperm.xlu0 %386, %v384
    %v388 = vpop.permute.xlu0 %387
    %v391 = vsel %vm214, %v383, 0
    %v394 = vsel %vm218, %v381, 0
    %v397 = vsel %vm218, %v382, 0
    %399 = vmatpush.bf16.msra.mxu0 0
    %400 = vmatpush.bf16.msra.mxu0 0
    %401 = vmatpush.bf16.msra.mxu0 0
    %402 = vmatpush.bf16.msra.mxu0 %v394
    %403 = vmatpush.bf16.msra.mxu0 %v379
    %404 = vmatpush.bf16.msra.mxu0 %v377
    %405 = vmatpush.bf16.msra.mxu0 %v375
    %406 = vmatpush.bf16.msra.mxu0 %v373
    %407 = vmatmul.bf16.gmra.mxu0 %v391
    %v408 = vpop.f32.mrf.mxu0
    %v409 = vadd.f32 %v388, %v408
    %v410 = vpop.f32.mrf.mxu0
    %411 = vdwg.mxu0
    %412 = vmatpush.bf16.msra.mxu0 0
    %413 = vmatpush.bf16.msra.mxu0 0
    %414 = vmatpush.bf16.msra.mxu0 0
    %415 = vmatpush.bf16.msra.mxu0 %v397
    %416 = vmatpush.bf16.msra.mxu0 %v380
    %417 = vmatpush.bf16.msra.mxu0 %v378
    %418 = vmatpush.bf16.msra.mxu0 %v376
    %419 = vmatpush.bf16.msra.mxu0 %v374
    %420 = vmatmul.bf16.gmra.mxu0 %v391
    %v421 = vpop.f32.mrf.mxu0
    %v422 = vadd.f32 %v388, %v421
    %v423 = vpop.f32.mrf.mxu0
    %424 = vdwg.mxu0
    %425 = vst [vmem:[%s6] sm:$0xff] %v409
    %426 = vst [vmem:[%s6 + $0x8] sm:$0xff] %v422
    // Predicated region
    $region38: #{forward.1} parent=1 // pred_check
      _
    $region39: #{forward.1} parent=1 // pred_check_branch
      %428 = sbr.rel (0) target = $region41
    $region40: #{forward.1} parent=1 // pred_region
      _
    $region41: #{forward.1} parent=1 // pred_fallthru
      _
    // Predicated region
    $region42: #{forward.1} parent=1 // pred_check
      _
    $region43: #{forward.1} parent=1 // pred_check_branch
      %430 = sbr.rel (0) target = $region45
    $region44: #{forward.1} parent=1 // pred_region
      _
    $region45: #{forward.1} parent=1 // pred_fallthru
      _
    %431 = vsyncpa [#allocation4], 1
    %432 = vsyncpa [#allocation6], 1

</llo_original>
